<compile_context>
chip_gen: v7x
topology: tpu7x:2x2x1
jax: 0.10.0
libtpu: 0.0.40
codegen_flags: <defaults>
</compile_context>

<pallas_src>
import jax
import jax.numpy as jnp
from jax.experimental import pallas as pl
from jax.experimental.pallas import tpu as pltpu


def self_attention_kernel(x_ref, xt_ref, wqk_ref, kvec_ref, wv_ref, bv_ref,
                          gamma_ref, o_ref):
    # x_ref:    (Bt, N, C)  bf16   (rows = spatial positions, channels last)
    # xt_ref:   (Bt, C, N)  bf16   (same data, channels-first -> used as "x^T")
    # wqk_ref:  (C, C)      bf16   Wq^T @ Wk  (fused query/key projection)
    # kvec_ref: (1, C)      f32    Wk^T @ bq  (only bias term that survives softmax)
    # wv_ref:   (C, C)      bf16   Wv^T
    # bv_ref:   (1, C)      f32
    # gamma_ref:(1, 1)      f32    in SMEM
    # o_ref:    (Bt, N, C)  f32
    Bt, N, C = x_ref.shape
    gamma = gamma_ref[0, 0]

    # Flatten the batch block into the row dim: (Bt*N, C) rows fill MXU sublanes.
    # (Leading-dim merge, minor dim unchanged -> layout-preserving reshape.)
    x2 = x_ref[...].reshape(Bt * N, C)

    # Fused Q.K^T projection (+ the surviving bq correction) and V projection.
    s = jnp.dot(x2, wqk_ref[...], preferred_element_type=jnp.float32) + kvec_ref[...]
    s_b16 = s.astype(jnp.bfloat16)                                   # (Bt*N, C)
    v_b16 = jnp.dot(x2, wv_ref[...],
                    preferred_element_type=jnp.float32).astype(jnp.bfloat16)  # (Bt*N, C)

    # Per-batch (N, N) energy + softmax + att@v.  Bt is small and static, so a
    # plain unrolled Python loop keeps all slices static.
    for b in range(Bt):
        s_b = s_b16[b * N:(b + 1) * N, :]                            # (N, C) bf16
        v_b = v_b16[b * N:(b + 1) * N, :]                            # (N, C) bf16

        # energy[n, m] = x_n Wqk x_m^T + x_m . (Wk^T bq)   (softmax-equivalent to torch)
        energy = jnp.dot(s_b, xt_ref[b], preferred_element_type=jnp.float32)  # (N, N)

        # Numerically-stable softmax over the last axis (f32 on the VPU/EUP).
        m = jnp.max(energy, axis=-1, keepdims=True)
        p = jnp.exp(energy - m)
        l = jnp.sum(p, axis=-1, keepdims=True)
        att = p * pl.reciprocal(l, approx=True)                      # (N, N) f32

        out_b = jnp.dot(att.astype(jnp.bfloat16), v_b,
                        preferred_element_type=jnp.float32) + bv_ref[...]      # (N, C) f32
        o_ref[b] = gamma * out_b


def self_attention_pallas(x, wq, bq, wk, bk, wv, bv, gamma, *, batch_block=None):
    """x: (B, C, W, H) float32 (NCHW, like the PyTorch module).
    Weights in PyTorch Conv2d 1x1 convention: wq/wk: (C//8, C), wv: (C, C), biases 1-D.
    `bk` is accepted for interface parity but is algebraically softmax-invariant
    (adds a per-row constant to the energy), so it never enters the kernel."""
    B, C, W, H = x.shape
    N = W * H

    if batch_block is None:
        # Enough rows per step to fill >=128 MXU sublanes when possible, but keep the
        # grid >= 2 steps (v7x has 2 TensorCores) whenever B allows it.
        batch_block = min(B, max(1, 128 // N))
        while batch_block > 1 and (B % batch_block != 0 or B // batch_block < 2):
            batch_block -= 1
    assert B % batch_block == 0, "batch_block must divide B"
    grid = (B // batch_block,)

    x_f32 = x.astype(jnp.float32)
    x_cn = x_f32.reshape(B, C, N)                                    # natural NCHW flatten
    x_nc_bf = x_cn.transpose(0, 2, 1).astype(jnp.bfloat16)           # (B, N, C)
    x_cn_bf = x_cn.astype(jnp.bfloat16)                              # (B, C, N)

    wq32 = wq.astype(jnp.float32)
    wk32 = wk.astype(jnp.float32)
    # Fused projection: Wqk = Wq_t @ Wk_t^T = wq^T @ wk   (C, C), computed in f32.
    wqk = (wq32.T @ wk32).astype(jnp.bfloat16)                       # (C, C)
    # Surviving bias term: kvec = Wk_t @ bq = wk^T @ bq   (C,)
    kvec_row = (wk32.T @ bq.astype(jnp.float32)).reshape(1, C)       # (1, C) f32
    wv_t = wv.T.astype(jnp.bfloat16)                                 # (C, C)
    bv_row = bv.reshape(1, C).astype(jnp.float32)                    # (1, C)
    g2 = jnp.asarray(gamma, jnp.float32).reshape(1, 1)               # (1, 1) -> SMEM

    out_nc = pl.pallas_call(
        self_attention_kernel,
        out_shape=jax.ShapeDtypeStruct((B, N, C), jnp.float32),
        grid_spec=pltpu.PrefetchScalarGridSpec(
            num_scalar_prefetch=0,
            grid=grid,
            in_specs=[
                pl.BlockSpec((batch_block, N, C), lambda b: (b, 0, 0)),   # x   (B,N,C)
                pl.BlockSpec((batch_block, C, N), lambda b: (b, 0, 0)),   # x^T (B,C,N)
                pl.BlockSpec((C, C), lambda b: (0, 0)),                   # Wqk
                pl.BlockSpec((1, C), lambda b: (0, 0)),                   # Wk^T bq
                pl.BlockSpec((C, C), lambda b: (0, 0)),                   # Wv^T
                pl.BlockSpec((1, C), lambda b: (0, 0)),                   # bv
                pl.BlockSpec(memory_space=pltpu.MemorySpace.SMEM),        # gamma (scalar)
            ],
            out_specs=pl.BlockSpec((batch_block, N, C), lambda b: (b, 0, 0)),
        ),
        compiler_params=pltpu.CompilerParams(
            dimension_semantics=("parallel",)),
    )(x_nc_bf, x_cn_bf, wqk, kvec_row, wv_t, bv_row, g2)

    # PyTorch does bmm(att, proj_value) -> (B, N, C) then .view(B, C, W, H): a raw
    # row-major reinterpretation (no transpose).  reshape reproduces it exactly.
    out_nchw = out_nc.reshape(B, C, W, H)
    return out_nchw + x_f32                  # gamma already applied in-kernel


def self_attention_ref(x, wq, bq, wk, bk, wv, bv, gamma):
    """Pure-JAX f32 replica of the PyTorch forward, for verification."""
    B, C, W, H = x.shape
    N = W * H
    xf = x.reshape(B, C, N)
    q = jnp.einsum('oc,bcn->bon', wq, xf) + bq[None, :, None]   # (B, Cq, N)
    k = jnp.einsum('oc,bcn->bon', wk, xf) + bk[None, :, None]   # (B, Cq, N)
    v = jnp.einsum('oc,bcn->bon', wv, xf) + bv[None, :, None]   # (B, C, N)
    proj_query = q.transpose(0, 2, 1)                           # (B, N, Cq)
    energy = jnp.einsum('bnc,bcm->bnm', proj_query, k)          # (B, N, N)
    att = jax.nn.softmax(energy, axis=-1)
    proj_value = v.transpose(0, 2, 1)                           # (B, N, C)
    out = jnp.einsum('bnm,bmc->bnc', att, proj_value)           # (B, N, C)
    out = out.reshape(B, C, W, H)                               # torch .view semantics
    return gamma * out + x


if __name__ == "__main__":
    # in_dim = 32 -> C//8 = 4 ; B=4 so batch_block=2 gives 128-row matmuls AND a
    # 2-step "parallel" grid (both v7x TensorCores busy).
    B, C, W, H = 4, 32, 8, 8
    Cq = C // 8

    key = jax.random.PRNGKey(0)
    kx, k1, k2, k3, k4, k5, k6 = jax.random.split(key, 7)

    x = jax.random.normal(kx, (B, C, W, H), dtype=jnp.float32)

    # Deterministic parameter init (module's __init__ gives shapes; gamma is zeros(1)
    # in torch — we use a nonzero value so the attention path actually contributes).
    scale = 1.0 / jnp.sqrt(jnp.float32(C))
    wq = jax.random.normal(k1, (Cq, C), dtype=jnp.float32) * scale
    bq = jax.random.normal(k2, (Cq,), dtype=jnp.float32) * 0.1
    wk = jax.random.normal(k3, (Cq, C), dtype=jnp.float32) * scale
    bk = jax.random.normal(k4, (Cq,), dtype=jnp.float32) * 0.1
    wv = jax.random.normal(k5, (C, C), dtype=jnp.float32) * scale
    bv = jax.random.normal(k6, (C,), dtype=jnp.float32) * 0.1
    gamma = jnp.float32(0.25)

    out = self_attention_pallas(x, wq, bq, wk, bk, wv, bv, gamma)
    out = jax.block_until_ready(out)

    ref = self_attention_ref(x, wq, bq, wk, bk, wv, bv, gamma)
    assert out.shape == (B, C, W, H)
    err = float(jnp.max(jnp.abs(out - ref)))
    # Tolerance sized for bf16 MXU operands (f32 accumulation) vs an all-f32 reference.
    assert jnp.allclose(out, ref, atol=5e-2, rtol=5e-2), f"mismatch: max abs err {err}"

    print("KERNEL_OK")
</pallas_src>

<mosaic_0001>
module attributes {stable_mosaic.version = 11 : i64} {
  func.func @self_attention_kernel(%arg0: i32, %arg1: memref<2x64x32xbf16, #tpu.memory_space<vmem>>, %arg2: memref<2x32x64xbf16, #tpu.memory_space<vmem>>, %arg3: memref<32x32xbf16, #tpu.memory_space<vmem>>, %arg4: memref<1x32xf32, #tpu.memory_space<vmem>>, %arg5: memref<32x32xbf16, #tpu.memory_space<vmem>>, %arg6: memref<1x32xf32, #tpu.memory_space<vmem>>, %arg7: memref<1x1xf32, #tpu.memory_space<smem>>, %arg8: memref<2x64x32xf32, #tpu.memory_space<vmem>>) attributes {dimension_semantics = [#tpu.dimension_semantics<parallel>], iteration_bounds = array<i64: 2>, scalar_prefetch = 0 : i64, scratch_operands = 0 : i64, tpu.core_type = #tpu.core_type<tc>, window_params = [{transform_indices = @transform_0, window_bounds = array<i64: 2, 64, 32>}, {transform_indices = @transform_1, window_bounds = array<i64: 2, 32, 64>}, {pipeline_mode = #tpu.pipeline_mode<synchronous>, transform_indices = @transform_2, window_bounds = array<i64: 32, 32>}, {pipeline_mode = #tpu.pipeline_mode<synchronous>, transform_indices = @transform_3, window_bounds = array<i64: 1, 32>}, {pipeline_mode = #tpu.pipeline_mode<synchronous>, transform_indices = @transform_4, window_bounds = array<i64: 32, 32>}, {pipeline_mode = #tpu.pipeline_mode<synchronous>, transform_indices = @transform_5, window_bounds = array<i64: 1, 32>}, {transform_indices = @transform_6, window_bounds = array<i64: 1, 1>}, {transform_indices = @transform_7, window_bounds = array<i64: 2, 64, 32>}]} {
    %c0 = arith.constant 0 : index
    %c0_0 = arith.constant 0 : index
    %0 = memref.load %arg7[%c0, %c0_0] : memref<1x1xf32, #tpu.memory_space<smem>>
    %c0_1 = arith.constant 0 : index
    %c0_2 = arith.constant 0 : index
    %c0_3 = arith.constant 0 : index
    %1 = vector.load %arg1[%c0_1, %c0_2, %c0_3] : memref<2x64x32xbf16, #tpu.memory_space<vmem>>, vector<2x64x32xbf16>
    %2 = vector.shape_cast %1 : vector<2x64x32xbf16> to vector<128x32xbf16>
    %c0_4 = arith.constant 0 : index
    %c0_5 = arith.constant 0 : index
    %3 = vector.load %arg3[%c0_4, %c0_5] : memref<32x32xbf16, #tpu.memory_space<vmem>>, vector<32x32xbf16>
    %cst = arith.constant dense<0.000000e+00> : vector<128x32xf32>
    %4 = tpu.matmul %2, %3, %cst {dimension_numbers = #tpu.dot_dimension_numbers<[1], [0], [0], [1], [0, 0, 1, 1], [], []>} : vector<128x32xbf16>, vector<32x32xbf16>, vector<128x32xf32> -> vector<128x32xf32>
    %c0_6 = arith.constant 0 : index
    %c0_7 = arith.constant 0 : index
    %5 = vector.load %arg4[%c0_6, %c0_7] : memref<1x32xf32, #tpu.memory_space<vmem>>, vector<1x32xf32>
    %6 = vector.broadcast %5 : vector<1x32xf32> to vector<128x32xf32>
    %7 = arith.addf %4, %6 : vector<128x32xf32>
    %8 = arith.truncf %7 : vector<128x32xf32> to vector<128x32xbf16>
    %c0_8 = arith.constant 0 : index
    %c0_9 = arith.constant 0 : index
    %9 = vector.load %arg5[%c0_8, %c0_9] : memref<32x32xbf16, #tpu.memory_space<vmem>>, vector<32x32xbf16>
    %cst_10 = arith.constant dense<0.000000e+00> : vector<128x32xf32>
    %10 = tpu.matmul %2, %9, %cst_10 {dimension_numbers = #tpu.dot_dimension_numbers<[1], [0], [0], [1], [0, 0, 1, 1], [], []>} : vector<128x32xbf16>, vector<32x32xbf16>, vector<128x32xf32> -> vector<128x32xf32>
    %11 = arith.truncf %10 : vector<128x32xf32> to vector<128x32xbf16>
    %12 = vector.extract_strided_slice %8 {offsets = [0, 0], sizes = [64, 32], strides = [1, 1]} : vector<128x32xbf16> to vector<64x32xbf16>
    %13 = vector.extract_strided_slice %11 {offsets = [0, 0], sizes = [64, 32], strides = [1, 1]} : vector<128x32xbf16> to vector<64x32xbf16>
    %c0_11 = arith.constant 0 : index
    %c0_12 = arith.constant 0 : index
    %c0_13 = arith.constant 0 : index
    %14 = vector.load %arg2[%c0_11, %c0_12, %c0_13] : memref<2x32x64xbf16, #tpu.memory_space<vmem>>, vector<1x32x64xbf16>
    %15 = vector.shape_cast %14 : vector<1x32x64xbf16> to vector<32x64xbf16>
    %cst_14 = arith.constant dense<0.000000e+00> : vector<64x64xf32>
    %16 = tpu.matmul %12, %15, %cst_14 {dimension_numbers = #tpu.dot_dimension_numbers<[1], [0], [0], [1], [0, 0, 1, 1], [], []>} : vector<64x32xbf16>, vector<32x64xbf16>, vector<64x64xf32> -> vector<64x64xf32>
    %cst_15 = arith.constant dense<0xFF800000> : vector<64xf32>
    %17 = vector.multi_reduction <maximumf>, %16, %cst_15 [1] : vector<64x64xf32> to vector<64xf32>
    %18 = vector.shape_cast %17 : vector<64xf32> to vector<64x1xf32>
    %19 = vector.broadcast %18 : vector<64x1xf32> to vector<64x64xf32>
    %20 = arith.subf %16, %19 : vector<64x64xf32>
    %21 = math.exp %20 : vector<64x64xf32>
    %cst_16 = arith.constant dense<0.000000e+00> : vector<64xf32>
    %22 = vector.multi_reduction <add>, %21, %cst_16 [1] : vector<64x64xf32> to vector<64xf32>
    %23 = vector.shape_cast %22 : vector<64xf32> to vector<64x1xf32>
    %24 = tpu.reciprocal %23 {approx = true} : vector<64x1xf32> -> vector<64x1xf32>
    %25 = vector.broadcast %24 : vector<64x1xf32> to vector<64x64xf32>
    %26 = arith.mulf %21, %25 : vector<64x64xf32>
    %27 = arith.truncf %26 : vector<64x64xf32> to vector<64x64xbf16>
    %cst_17 = arith.constant dense<0.000000e+00> : vector<64x32xf32>
    %28 = tpu.matmul %27, %13, %cst_17 {dimension_numbers = #tpu.dot_dimension_numbers<[1], [0], [0], [1], [0, 0, 1, 1], [], []>} : vector<64x64xbf16>, vector<64x32xbf16>, vector<64x32xf32> -> vector<64x32xf32>
    %c0_18 = arith.constant 0 : index
    %c0_19 = arith.constant 0 : index
    %29 = vector.load %arg6[%c0_18, %c0_19] : memref<1x32xf32, #tpu.memory_space<vmem>>, vector<1x32xf32>
    %30 = vector.broadcast %29 : vector<1x32xf32> to vector<64x32xf32>
    %31 = arith.addf %28, %30 : vector<64x32xf32>
    %32 = vector.broadcast %0 : f32 to vector<64x32xf32>
    %33 = arith.mulf %32, %31 : vector<64x32xf32>
    %c0_20 = arith.constant 0 : index
    %c0_21 = arith.constant 0 : index
    %c0_22 = arith.constant 0 : index
    %34 = vector.load %arg8[%c0_20, %c0_21, %c0_22] : memref<2x64x32xf32, #tpu.memory_space<vmem>>, vector<1x64x32xf32>
    %35 = vector.shape_cast %34 : vector<1x64x32xf32> to vector<64x32xf32>
    %36 = vector.shape_cast %33 : vector<64x32xf32> to vector<1x64x32xf32>
    tpu.vector_store %arg8[%c0_20, %c0_21, %c0_22], %36 {strides = array<i32>} : memref<2x64x32xf32, #tpu.memory_space<vmem>>, vector<1x64x32xf32>,
    %37 = vector.extract_strided_slice %8 {offsets = [64, 0], sizes = [64, 32], strides = [1, 1]} : vector<128x32xbf16> to vector<64x32xbf16>
    %38 = vector.extract_strided_slice %11 {offsets = [64, 0], sizes = [64, 32], strides = [1, 1]} : vector<128x32xbf16> to vector<64x32xbf16>
    %c1 = arith.constant 1 : index
    %c0_23 = arith.constant 0 : index
    %c0_24 = arith.constant 0 : index
    %39 = vector.load %arg2[%c1, %c0_23, %c0_24] : memref<2x32x64xbf16, #tpu.memory_space<vmem>>, vector<1x32x64xbf16>
    %40 = vector.shape_cast %39 : vector<1x32x64xbf16> to vector<32x64xbf16>
    %cst_25 = arith.constant dense<0.000000e+00> : vector<64x64xf32>
    %41 = tpu.matmul %37, %40, %cst_25 {dimension_numbers = #tpu.dot_dimension_numbers<[1], [0], [0], [1], [0, 0, 1, 1], [], []>} : vector<64x32xbf16>, vector<32x64xbf16>, vector<64x64xf32> -> vector<64x64xf32>
    %cst_26 = arith.constant dense<0xFF800000> : vector<64xf32>
    %42 = vector.multi_reduction <maximumf>, %41, %cst_26 [1] : vector<64x64xf32> to vector<64xf32>
    %43 = vector.shape_cast %42 : vector<64xf32> to vector<64x1xf32>
    %44 = vector.broadcast %43 : vector<64x1xf32> to vector<64x64xf32>
    %45 = arith.subf %41, %44 : vector<64x64xf32>
    %46 = math.exp %45 : vector<64x64xf32>
    %cst_27 = arith.constant dense<0.000000e+00> : vector<64xf32>
    %47 = vector.multi_reduction <add>, %46, %cst_27 [1] : vector<64x64xf32> to vector<64xf32>
    %48 = vector.shape_cast %47 : vector<64xf32> to vector<64x1xf32>
    %49 = tpu.reciprocal %48 {approx = true} : vector<64x1xf32> -> vector<64x1xf32>
    %50 = vector.broadcast %49 : vector<64x1xf32> to vector<64x64xf32>
    %51 = arith.mulf %46, %50 : vector<64x64xf32>
    %52 = arith.truncf %51 : vector<64x64xf32> to vector<64x64xbf16>
    %cst_28 = arith.constant dense<0.000000e+00> : vector<64x32xf32>
    %53 = tpu.matmul %52, %38, %cst_28 {dimension_numbers = #tpu.dot_dimension_numbers<[1], [0], [0], [1], [0, 0, 1, 1], [], []>} : vector<64x64xbf16>, vector<64x32xbf16>, vector<64x32xf32> -> vector<64x32xf32>
    %c0_29 = arith.constant 0 : index
    %c0_30 = arith.constant 0 : index
    %54 = vector.load %arg6[%c0_29, %c0_30] : memref<1x32xf32, #tpu.memory_space<vmem>>, vector<1x32xf32>
    %55 = vector.broadcast %54 : vector<1x32xf32> to vector<64x32xf32>
    %56 = arith.addf %53, %55 : vector<64x32xf32>
    %57 = vector.broadcast %0 : f32 to vector<64x32xf32>
    %58 = arith.mulf %57, %56 : vector<64x32xf32>
    %c1_31 = arith.constant 1 : index
    %c0_32 = arith.constant 0 : index
    %c0_33 = arith.constant 0 : index
    %59 = vector.load %arg8[%c1_31, %c0_32, %c0_33] : memref<2x64x32xf32, #tpu.memory_space<vmem>>, vector<1x64x32xf32>
    %60 = vector.shape_cast %59 : vector<1x64x32xf32> to vector<64x32xf32>
    %61 = vector.shape_cast %58 : vector<64x32xf32> to vector<1x64x32xf32>
    tpu.vector_store %arg8[%c1_31, %c0_32, %c0_33], %61 {strides = array<i32>} : memref<2x64x32xf32, #tpu.memory_space<vmem>>, vector<1x64x32xf32>,
    return
  }
  func.func @transform_0(%arg0: i32) -> (i32, i32, i32) {
    %c0_i32 = arith.constant 0 : i32
    %c0_i32_0 = arith.constant 0 : i32
    %c0_i32_1 = arith.constant 0 : i32
    return %arg0, %c0_i32, %c0_i32_0 : i32, i32, i32
  }
  func.func @transform_1(%arg0: i32) -> (i32, i32, i32) {
    %c0_i32 = arith.constant 0 : i32
    %c0_i32_0 = arith.constant 0 : i32
    %c0_i32_1 = arith.constant 0 : i32
    return %arg0, %c0_i32, %c0_i32_0 : i32, i32, i32
  }
  func.func @transform_2(%arg0: i32) -> (i32, i32) {
    %c0_i32 = arith.constant 0 : i32
    %c0_i32_0 = arith.constant 0 : i32
    %c0_i32_1 = arith.constant 0 : i32
    return %c0_i32, %c0_i32_0 : i32, i32
  }
  func.func @transform_3(%arg0: i32) -> (i32, i32) {
    %c0_i32 = arith.constant 0 : i32
    %c0_i32_0 = arith.constant 0 : i32
    %c0_i32_1 = arith.constant 0 : i32
    return %c0_i32, %c0_i32_0 : i32, i32
  }
  func.func @transform_4(%arg0: i32) -> (i32, i32) {
    %c0_i32 = arith.constant 0 : i32
    %c0_i32_0 = arith.constant 0 : i32
    %c0_i32_1 = arith.constant 0 : i32
    return %c0_i32, %c0_i32_0 : i32, i32
  }
  func.func @transform_5(%arg0: i32) -> (i32, i32) {
    %c0_i32 = arith.constant 0 : i32
    %c0_i32_0 = arith.constant 0 : i32
    %c0_i32_1 = arith.constant 0 : i32
    return %c0_i32, %c0_i32_0 : i32, i32
  }
  func.func @transform_6(%arg0: i32) -> (i32, i32) {
    %c0_i32 = arith.constant 0 : i32
    %c0_i32_0 = arith.constant 0 : i32
    %c0_i32_1 = arith.constant 0 : i32
    return %c0_i32, %c0_i32_0 : i32, i32
  }
  func.func @transform_7(%arg0: i32) -> (i32, i32, i32) {
    %c0_i32 = arith.constant 0 : i32
    %c0_i32_0 = arith.constant 0 : i32
    %c0_i32_1 = arith.constant 0 : i32
    return %arg0, %c0_i32, %c0_i32_0 : i32, i32, i32
  }
}

</mosaic_0001>

<llo_original>
// kernel: tpu_custom_call.1
$region0: #{tpu_custom_call.1}
  #allocation0 [shape = 'u32[]', space=smem, size = 0x4, offset = 0x4, fixed_abs, tag = 'smem constant byte address 0x4 - core index']
  #allocation1 [shape = 'u32[144,128]{1,0:T(1,128)}', space=vmem, size = 0x12000, scoped, tag = 'internal scratch']
  #allocation2 [shape = 'f32[1,1]{1,0:T(1,128)S(6)}', space=smem, size = 0x200, scoped, tag = 'scoped memory for tpu_custom_call.1']
  %s0 = inlined_call_operand.vmem [shape: bf16[4,64,32], index: 0, kind: input, shape index: {}]
  %s1 = inlined_call_operand.vmem [shape: bf16[4,32,64], index: 1, kind: input, shape index: {}]
  %s2 = inlined_call_operand.vmem [shape: bf16[32,32], index: 2, kind: input, shape index: {}]
  %s3 = inlined_call_operand.vmem [shape: f32[1,32], index: 3, kind: input, shape index: {}]
  %s4 = inlined_call_operand.vmem [shape: bf16[32,32], index: 4, kind: input, shape index: {}]
  %s5 = inlined_call_operand.vmem [shape: f32[1,32], index: 5, kind: input, shape index: {}]
  %s6 = inlined_call_operand.<no memory space> [shape: f32[1,1], index: 6, kind: input, shape index: {}]
  %s7 = inlined_call_operand.vmem [shape: f32[4,64,32], index: 7, kind: output, shape index: {}]
  %s8 = sld [smem:[#allocation0]]
  $region61: #{tpu_custom_call.1} parent=0
    _
  %s10 = ssub.s32 1, %s8
  %s11 = scalar_select 0, %s10, %s8
  %12 = sst [smem:[#allocation2]] %s6
  loop: start=0, step=1, limit=4
  $region2: #{tpu_custom_call.1} parent=0 // loop_pre_header
    _
  $region3: #{tpu_custom_call.1} parent=0 // loop_header
    %s14 = sphi 0, %s18
    %p15 = scmp.ge.s32.totalorder %s14, 4
    %s24 = sphi 0, %s26
    %s27 = sphi 0, %s24
    %s28 = sphi 0, %s27
    %s44 = sphi 0, %s28
    %s50 = sphi 0, %s52
    %s53 = sphi 0, %s50
    %s54 = sphi 0, %s53
    %s70 = sphi 0, %s54
    %s74 = sphi 0, %s74
    %s76 = sphi 0, %s74
    %s77 = sphi 0, %s76
    %s91 = sphi 0, %s77
    %s95 = sphi 0, %s95
    %s97 = sphi 0, %s95
    %s98 = sphi 0, %s97
    %s112 = sphi 0, %s98
    %s116 = sphi 0, %s116
    %s118 = sphi 0, %s116
    %s119 = sphi 0, %s118
    %s133 = sphi 0, %s119
    %s137 = sphi 0, %s137
    %s139 = sphi 0, %s137
    %s140 = sphi 0, %s139
    %s154 = sphi 0, %s140
    %s158 = sphi 0, %s158
    %s160 = sphi 0, %s158
    %s161 = sphi 0, %s160
    %s175 = sphi 0, %s161
    %s181 = sphi 0, %s183
    %s184 = sphi 0, %s181
    %s185 = sphi 0, %s184
    %s201 = sphi 0, %s185
  $region4: #{tpu_custom_call.1} parent=0 // loop_header_branch
    %17 = sbr.rel (%p15) target = $region8
  $region5: #{tpu_custom_call.1} parent=0 // loop_body
    %s19 = ssub.s32 %s14, 1
    %s20 = ssub.s32 %s14, 2
    %s21 = sadd.s32 %s14, 1
    %s22 = ssub.s32 %s14, %s21
    %p23 = scmp.eq.s32.totalorder %s22, 0
    %s25 = sadd.s32 %s24, 1
    %s26 = scalar_select %p23, %s24, %s25
    %p29 = pneg %p23
    %p30 = scmp.eq.s32.totalorder %s14, 1
    %p31 = por %p29, %p30
    %p32 = scmp.ne.s32.totalorder %s24, %s27
    %p33 = scmp.eq.s32.totalorder %s14, 0
    %p34 = por %p32, %p33
    %p35 = scmp.ne.s32.totalorder %s24, %s27
    %p36 = scmp.eq.s32.totalorder %s19, 1
    %p37 = por %p35, %p36
    %p38 = scmp.ne.s32.totalorder %s27, %s28
    %p39 = scmp.eq.s32.totalorder %s19, 0
    %p40 = por %p38, %p39
    %p41 = scmp.ne.s32.totalorder %s27, %s28
    %p42 = scmp.eq.s32.totalorder %s20, 1
    %p43 = por %p41, %p42
    %p45 = scmp.ne.s32.totalorder %s28, %s44
    %p46 = scmp.eq.s32.totalorder %s20, 0
    %p47 = por %p45, %p46
    %s48 = ssub.s32 %s14, %s21
    %p49 = scmp.eq.s32.totalorder %s48, 0
    %s51 = sadd.s32 %s50, 1
    %s52 = scalar_select %p49, %s50, %s51
    %p55 = pneg %p49
    %p56 = scmp.eq.s32.totalorder %s14, 1
    %p57 = por %p55, %p56
    %p58 = scmp.ne.s32.totalorder %s50, %s53
    %p59 = scmp.eq.s32.totalorder %s14, 0
    %p60 = por %p58, %p59
    %p61 = scmp.ne.s32.totalorder %s50, %s53
    %p62 = scmp.eq.s32.totalorder %s19, 1
    %p63 = por %p61, %p62
    %p64 = scmp.ne.s32.totalorder %s53, %s54
    %p65 = scmp.eq.s32.totalorder %s19, 0
    %p66 = por %p64, %p65
    %p67 = scmp.ne.s32.totalorder %s53, %s54
    %p68 = scmp.eq.s32.totalorder %s20, 1
    %p69 = por %p67, %p68
    %p71 = scmp.ne.s32.totalorder %s54, %s70
    %p72 = scmp.eq.s32.totalorder %s20, 0
    %p73 = por %p71, %p72
    %s75 = sadd.s32 %s74, 1
    %p78 = scmp.eq.s32.totalorder %s14, 1
    %p79 = scmp.ne.s32.totalorder %s74, %s76
    %p80 = scmp.eq.s32.totalorder %s14, 0
    %p81 = por %p79, %p80
    %p82 = scmp.ne.s32.totalorder %s74, %s76
    %p83 = scmp.eq.s32.totalorder %s19, 1
    %p84 = por %p82, %p83
    %p85 = scmp.ne.s32.totalorder %s76, %s77
    %p86 = scmp.eq.s32.totalorder %s19, 0
    %p87 = por %p85, %p86
    %p88 = scmp.ne.s32.totalorder %s76, %s77
    %p89 = scmp.eq.s32.totalorder %s20, 1
    %p90 = por %p88, %p89
    %p92 = scmp.ne.s32.totalorder %s77, %s91
    %p93 = scmp.eq.s32.totalorder %s20, 0
    %p94 = por %p92, %p93
    %s96 = sadd.s32 %s95, 1
    %p99 = scmp.eq.s32.totalorder %s14, 1
    %p100 = scmp.ne.s32.totalorder %s95, %s97
    %p101 = scmp.eq.s32.totalorder %s14, 0
    %p102 = por %p100, %p101
    %p103 = scmp.ne.s32.totalorder %s95, %s97
    %p104 = scmp.eq.s32.totalorder %s19, 1
    %p105 = por %p103, %p104
    %p106 = scmp.ne.s32.totalorder %s97, %s98
    %p107 = scmp.eq.s32.totalorder %s19, 0
    %p108 = por %p106, %p107
    %p109 = scmp.ne.s32.totalorder %s97, %s98
    %p110 = scmp.eq.s32.totalorder %s20, 1
    %p111 = por %p109, %p110
    %p113 = scmp.ne.s32.totalorder %s98, %s112
    %p114 = scmp.eq.s32.totalorder %s20, 0
    %p115 = por %p113, %p114
    %s117 = sadd.s32 %s116, 1
    %p120 = scmp.eq.s32.totalorder %s14, 1
    %p121 = scmp.ne.s32.totalorder %s116, %s118
    %p122 = scmp.eq.s32.totalorder %s14, 0
    %p123 = por %p121, %p122
    %p124 = scmp.ne.s32.totalorder %s116, %s118
    %p125 = scmp.eq.s32.totalorder %s19, 1
    %p126 = por %p124, %p125
    %p127 = scmp.ne.s32.totalorder %s118, %s119
    %p128 = scmp.eq.s32.totalorder %s19, 0
    %p129 = por %p127, %p128
    %p130 = scmp.ne.s32.totalorder %s118, %s119
    %p131 = scmp.eq.s32.totalorder %s20, 1
    %p132 = por %p130, %p131
    %p134 = scmp.ne.s32.totalorder %s119, %s133
    %p135 = scmp.eq.s32.totalorder %s20, 0
    %p136 = por %p134, %p135
    %s138 = sadd.s32 %s137, 1
    %p141 = scmp.eq.s32.totalorder %s14, 1
    %p142 = scmp.ne.s32.totalorder %s137, %s139
    %p143 = scmp.eq.s32.totalorder %s14, 0
    %p144 = por %p142, %p143
    %p145 = scmp.ne.s32.totalorder %s137, %s139
    %p146 = scmp.eq.s32.totalorder %s19, 1
    %p147 = por %p145, %p146
    %p148 = scmp.ne.s32.totalorder %s139, %s140
    %p149 = scmp.eq.s32.totalorder %s19, 0
    %p150 = por %p148, %p149
    %p151 = scmp.ne.s32.totalorder %s139, %s140
    %p152 = scmp.eq.s32.totalorder %s20, 1
    %p153 = por %p151, %p152
    %p155 = scmp.ne.s32.totalorder %s140, %s154
    %p156 = scmp.eq.s32.totalorder %s20, 0
    %p157 = por %p155, %p156
    %s159 = sadd.s32 %s158, 1
    %p162 = scmp.eq.s32.totalorder %s14, 1
    %p163 = scmp.ne.s32.totalorder %s158, %s160
    %p164 = scmp.eq.s32.totalorder %s14, 0
    %p165 = por %p163, %p164
    %p166 = scmp.ne.s32.totalorder %s158, %s160
    %p167 = scmp.eq.s32.totalorder %s19, 1
    %p168 = por %p166, %p167
    %p169 = scmp.ne.s32.totalorder %s160, %s161
    %p170 = scmp.eq.s32.totalorder %s19, 0
    %p171 = por %p169, %p170
    %p172 = scmp.ne.s32.totalorder %s160, %s161
    %p173 = scmp.eq.s32.totalorder %s20, 1
    %p174 = por %p172, %p173
    %p176 = scmp.ne.s32.totalorder %s161, %s175
    %p177 = scmp.eq.s32.totalorder %s20, 0
    %p178 = por %p176, %p177
    %s179 = ssub.s32 %s14, %s21
    %p180 = scmp.eq.s32.totalorder %s179, 0
    %s182 = sadd.s32 %s181, 1
    %s183 = scalar_select %p180, %s181, %s182
    %p186 = pneg %p180
    %p187 = scmp.eq.s32.totalorder %s14, 1
    %p188 = por %p186, %p187
    %p189 = scmp.ne.s32.totalorder %s181, %s184
    %p190 = scmp.eq.s32.totalorder %s14, 0
    %p191 = por %p189, %p190
    %p192 = scmp.ne.s32.totalorder %s181, %s184
    %p193 = scmp.eq.s32.totalorder %s19, 1
    %p194 = por %p192, %p193
    %p195 = scmp.ne.s32.totalorder %s184, %s185
    %p196 = scmp.eq.s32.totalorder %s19, 0
    %p197 = por %p195, %p196
    %p198 = scmp.ne.s32.totalorder %s184, %s185
    %p199 = scmp.eq.s32.totalorder %s20, 1
    %p200 = por %p198, %p199
    %p202 = scmp.ne.s32.totalorder %s185, %s201
    %p203 = scmp.eq.s32.totalorder %s20, 0
    %p204 = por %p202, %p203
    %p205 = scmp.le.s32.totalorder 1, %s14
    %p206 = scmp.lt.s32.totalorder %s14, 3
    %p207 = pnand %p205, %p206
    %p208 = pneg %p207
    // Predicated region
    $region9: #{tpu_custom_call.1} parent=5 // pred_check
      _
    $region10: #{tpu_custom_call.1} parent=5 // pred_check_branch
      %210 = sbr.rel (%p207) target = $region12
    $region11: #{tpu_custom_call.1} parent=5 // pred_region
      %s211 = ssub.s32 %s14, 1
      // Predicated region
      $region13: #{tpu_custom_call.1} parent=11 // pred_check
        %p212 = pneg %p87
      $region14: #{tpu_custom_call.1} parent=11 // pred_check_branch
        %214 = sbr.rel (%p212) target = $region16
      $region15: #{tpu_custom_call.1} parent=11 // pred_region
        _
      $region16: #{tpu_custom_call.1} parent=11 // pred_fallthru
        _
      // Predicated region
      $region17: #{tpu_custom_call.1} parent=11 // pred_check
        %p215 = pneg %p108
      $region18: #{tpu_custom_call.1} parent=11 // pred_check_branch
        %217 = sbr.rel (%p215) target = $region20
      $region19: #{tpu_custom_call.1} parent=11 // pred_region
        _
      $region20: #{tpu_custom_call.1} parent=11 // pred_fallthru
        _
      // Predicated region
      $region21: #{tpu_custom_call.1} parent=11 // pred_check
        %p218 = pneg %p129
      $region22: #{tpu_custom_call.1} parent=11 // pred_check_branch
        %220 = sbr.rel (%p218) target = $region24
      $region23: #{tpu_custom_call.1} parent=11 // pred_region
        _
      $region24: #{tpu_custom_call.1} parent=11 // pred_fallthru
        _
      // Predicated region
      $region25: #{tpu_custom_call.1} parent=11 // pred_check
        %p221 = pneg %p150
      $region26: #{tpu_custom_call.1} parent=11 // pred_check_branch
        %223 = sbr.rel (%p221) target = $region28
      $region27: #{tpu_custom_call.1} parent=11 // pred_region
        _
      $region28: #{tpu_custom_call.1} parent=11 // pred_fallthru
        _
      // Predicated region
      $region29: #{tpu_custom_call.1} parent=11 // pred_check
        %p224 = pneg %p171
      $region30: #{tpu_custom_call.1} parent=11 // pred_check_branch
        %226 = sbr.rel (%p224) target = $region32
      $region31: #{tpu_custom_call.1} parent=11 // pred_region
        _
      $region32: #{tpu_custom_call.1} parent=11 // pred_fallthru
        _
    $region12: #{tpu_custom_call.1} parent=5 // pred_fallthru
      _
    %p227 = scmp.lt.s32.totalorder %s14, 2
    // Predicated region
    $region33: #{tpu_custom_call.1} parent=5 // pred_check
      %p228 = pneg %p227
    $region34: #{tpu_custom_call.1} parent=5 // pred_check_branch
      %230 = sbr.rel (%p228) target = $region36
    $region35: #{tpu_custom_call.1} parent=5 // pred_region
      // Predicated region
      $region37: #{tpu_custom_call.1} parent=35 // pred_check
        %p231 = pneg %p34
      $region38: #{tpu_custom_call.1} parent=35 // pred_check_branch
        %233 = sbr.rel (%p231) target = $region40
      $region39: #{tpu_custom_call.1} parent=35 // pred_region
        %s234 = smul.u32 2, %s14
        %p235 = scmp.lt.s32.totalorder %s234, 3
        %s236 = scalar_select %p235, %s234, 3
        %s237 = smul.addr %s236, 8
        %s238 = smul.addr %s237, 4
        %s239 = scalar_lea.vmem %s0, %s238
        %s240 = smul.u32 2, %s14
      $region40: #{tpu_custom_call.1} parent=35 // pred_fallthru
        _
      // Predicated region
      $region41: #{tpu_custom_call.1} parent=35 // pred_check
        %p241 = pneg %p60
      $region42: #{tpu_custom_call.1} parent=35 // pred_check_branch
        %243 = sbr.rel (%p241) target = $region44
      $region43: #{tpu_custom_call.1} parent=35 // pred_region
        %s244 = smul.u32 2, %s14
        %p245 = scmp.lt.s32.totalorder %s244, 3
        %s246 = scalar_select %p245, %s244, 3
        %s247 = smul.addr %s246, 4
        %s248 = smul.addr %s247, 4
        %s249 = scalar_lea.vmem %s1, %s248
        %s250 = smul.u32 2, %s14
      $region44: #{tpu_custom_call.1} parent=35 // pred_fallthru
        _
    $region36: #{tpu_custom_call.1} parent=5 // pred_fallthru
      _
    %p251 = scmp.le.s32.totalorder 1, %s14
    %p252 = scmp.lt.s32.totalorder %s14, 3
    %p253 = pnand %p251, %p252
    %p254 = pneg %p253
    // Predicated region
    $region45: #{tpu_custom_call.1} parent=5 // pred_check
      _
    $region46: #{tpu_custom_call.1} parent=5 // pred_check_branch
      %256 = sbr.rel (%p253) target = $region48
    $region47: #{tpu_custom_call.1} parent=5 // pred_region
      %s257 = ssub.s32 %s14, 1
      %s258 = smul.u32 2, %s19
      %p259 = scmp.lt.s32.totalorder %s258, 3
      %s260 = scalar_select %p259, %s258, 3
      %s261 = smul.addr %s260, 8
      %s262 = smul.addr %s261, 4
      %s263 = scalar_lea.vmem %s0, %s262
      %p264 = pneg %p40
      %p265 = pneg %p37
      %s266 = smul.u32 2, %s19
      %p267 = scmp.lt.s32.totalorder %s266, 3
      %s268 = scalar_select %p267, %s266, 3
      %s269 = smul.addr %s268, 4
      %s270 = smul.addr %s269, 4
      %s271 = scalar_lea.vmem %s1, %s270
      %p272 = pneg %p66
      %p273 = pneg %p63
      %p274 = pneg %p87
      %p275 = pneg %p84
      %p276 = pneg %p108
      %p277 = pneg %p105
      %p278 = pneg %p129
      %p279 = pneg %p126
      %p280 = pneg %p150
      %p281 = pneg %p147
      %p282 = pneg %p171
      %p283 = pneg %p168
      %p284 = pneg %p197
      %p285 = pneg %p194
      %s286 = smul.u32 2, %s19
      %p287 = scmp.lt.s32.totalorder %s286, 3
      %s288 = scalar_select %p287, %s286, 3
      %s289 = smul.addr %s288, 8
      %s290 = smul.addr %s289, 8
      %s291 = scalar_lea.vmem %s7, %s290
      %s292 = smul.u32 2, %s19
      %p293 = scmp.lt.s32.totalorder %s292, 3
      %s294 = scalar_select %p293, %s292, 3
      %s295 = smul.addr %s294, 8
      %s296 = smul.addr %s295, 4
      %s297 = scalar_lea.vmem %s0, %s296
      %s298 = smul.u32 2, %s19
      %s299 = smul.u32 2, %s19
      %p300 = scmp.lt.s32.totalorder %s299, 3
      %s301 = scalar_select %p300, %s299, 3
      %s302 = smul.addr %s301, 4
      %s303 = smul.addr %s302, 4
      %s304 = scalar_lea.vmem %s1, %s303
      %s305 = smul.u32 2, %s19
      %s306 = smul.u32 2, %s19
      %p307 = scmp.lt.s32.totalorder %s306, 3
      %s308 = scalar_select %p307, %s306, 3
      %s309 = smul.addr %s308, 8
      %s310 = smul.addr %s309, 8
      %s311 = scalar_lea.vmem %s7, %s310
      %s312 = smul.u32 2, %s19
      %s314 = sld [smem:[#allocation2]]
      %v315 = vld [vmem:[%s297] sm:$0xf]
      %v316 = vld [vmem:[%s297 + $0x4] sm:$0xf]
      %v317 = vld [vmem:[%s297 + $0x8] sm:$0xf]
      %v318 = vld [vmem:[%s297 + $0xc] sm:$0xf]
      %v319 = vld [vmem:[%s297 + $0x10] sm:$0xf]
      %v320 = vld [vmem:[%s297 + $0x14] sm:$0xf]
      %v321 = vld [vmem:[%s297 + $0x18] sm:$0xf]
      %v322 = vld [vmem:[%s297 + $0x1c] sm:$0xf]
      %v323 = vld [vmem:[%s297 + $0x20] sm:$0xf]
      %v324 = vld [vmem:[%s297 + $0x24] sm:$0xf]
      %v325 = vld [vmem:[%s297 + $0x28] sm:$0xf]
      %v326 = vld [vmem:[%s297 + $0x2c] sm:$0xf]
      %v327 = vld [vmem:[%s297 + $0x30] sm:$0xf]
      %v328 = vld [vmem:[%s297 + $0x34] sm:$0xf]
      %v329 = vld [vmem:[%s297 + $0x38] sm:$0xf]
      %v330 = vld [vmem:[%s297 + $0x3c] sm:$0xf]
      %v331 = vld [vmem:[%s2] sm:$0xf]
      %v332 = vld [vmem:[%s2 + $0x4] sm:$0xf]
      %v333 = vld [vmem:[%s2 + $0x8] sm:$0xf]
      %v334 = vld [vmem:[%s2 + $0xc] sm:$0xf]
      %v335 = vld [vmem:[%s3] sm:$0x1]
      %v337 = vlaneseq
      %v338 = vshrl.u32 %v337, 7
      %v339 = vsub.s32 0, %v338
      %v340 = vrot.slane %v335, %v339
      %v358 = vunpack.c.l.b16 %v315
      %v359 = vunpack.c.l.b16 %v316
      %v360 = vunpack.c.l.b16 %v317
      %v361 = vunpack.c.l.b16 %v318
      %v362 = vunpack.c.l.b16 %v319
      %v363 = vunpack.c.l.b16 %v320
      %v364 = vunpack.c.l.b16 %v321
      %v365 = vunpack.c.l.b16 %v322
      %v366 = vunpack.c.l.b16 %v323
      %v367 = vunpack.c.l.b16 %v324
      %v368 = vunpack.c.l.b16 %v325
      %v369 = vunpack.c.l.b16 %v326
      %v370 = vunpack.c.l.b16 %v327
      %v371 = vunpack.c.l.b16 %v328
      %v372 = vunpack.c.l.b16 %v329
      %v373 = vunpack.c.l.b16 %v330
      %v374 = vpack.c.b16 %v359, %v358
      %v375 = vpack.c.b16 %v361, %v360
      %v376 = vpack.c.b16 %v363, %v362
      %v377 = vpack.c.b16 %v365, %v364
      %v378 = vpack.c.b16 %v367, %v366
      %v379 = vpack.c.b16 %v369, %v368
      %v380 = vpack.c.b16 %v371, %v370
      %v381 = vpack.c.b16 %v373, %v372
      %v386 = vunpack.c.l.b16 %v331
      %v387 = vunpack.c.l.b16 %v332
      %v388 = vunpack.c.l.b16 %v333
      %v389 = vunpack.c.l.b16 %v334
      %v390 = vpack.c.b16 %v387, %v386
      %v391 = vpack.c.b16 %v389, %v388
      %vm394 = vcmask 261120
      %v396 = vsel %vm394, %v374, 0
      %v399 = vsel %vm394, %v375, 0
      %v402 = vsel %vm394, %v376, 0
      %v405 = vsel %vm394, %v377, 0
      %v408 = vsel %vm394, %v378, 0
      %v411 = vsel %vm394, %v379, 0
      %v414 = vsel %vm394, %v380, 0
      %v417 = vsel %vm394, %v381, 0
      %419 = vmatprep.subr.bf16.mxu0 0
      %420 = vmatpush1.bf16.msra.mxu0 %v390
      %421 = vmatprep.subr.bf16.mxu0 0
      %422 = vmatpush1.bf16.msra.mxu0 %v391
      %423 = vmatprep.subr.bf16.mxu0 0
      %424 = vmatpush1.bf16.msra.mxu0 0
      %425 = vmatprep.subr.bf16.mxu0 0
      %426 = vmatpush1.bf16.msra.mxu0 0
      %427 = vmatprep.subr.bf16.mxu0 0
      %428 = vmatpush1.bf16.msra.mxu0 0
      %429 = vmatprep.subr.bf16.mxu0 0
      %430 = vmatpush1.bf16.msra.mxu0 0
      %431 = vmatprep.subr.bf16.mxu0 0
      %432 = vmatpush1.bf16.msra.mxu0 0
      %433 = vmatprep.subr.bf16.mxu0 0
      %434 = vmatpush1.bf16.msra.mxu0 0
      %435 = vmatprep.subr.bf16.mxu0 0
      %436 = vmatpush1.bf16.msra.mxu0 0
      %437 = vmatprep.subr.bf16.mxu0 0
      %438 = vmatpush1.bf16.msra.mxu0 0
      %439 = vmatprep.subr.bf16.mxu0 0
      %440 = vmatpush1.bf16.msra.mxu0 0
      %441 = vmatprep.subr.bf16.mxu0 0
      %442 = vmatpush1.bf16.msra.mxu0 0
      %443 = vmatprep.subr.bf16.mxu0 0
      %444 = vmatpush1.bf16.msra.mxu0 0
      %445 = vmatprep.subr.bf16.mxu0 0
      %446 = vmatpush1.bf16.msra.mxu0 0
      %447 = vmatprep.subr.bf16.mxu0 0
      %448 = vmatpush1.bf16.msra.mxu0 0
      %449 = vmatprep.subr.bf16.mxu0 0
      %450 = vmatpush1.bf16.msra.mxu0 0
      %451 = vmatprep.mubr.bf16.mxu0 0
      %452 = vmatmul.mubr.bf16.gmra.mrb[0].mxu0 %v396
      %v453 = vpop.f32.mrb[0].mxu0
      %v454 = vadd.f32 %v340, %v453
      %v455 = vpop.f32.mrb[0].mxu0
      %v456 = vpop.f32.mrb[0].mxu0
      %v457 = vadd.f32 %v340, %v456
      %v458 = vpop.f32.mrb[0].mxu0
      %459 = vmatprep.mubr.bf16.mxu0 0
      %460 = vmatmul.mubr.bf16.gmra.mrb[0].mxu0 %v399
      %v461 = vpop.f32.mrb[0].mxu0
      %v462 = vadd.f32 %v340, %v461
      %v463 = vpop.f32.mrb[0].mxu0
      %v464 = vpop.f32.mrb[0].mxu0
      %v465 = vadd.f32 %v340, %v464
      %v466 = vpop.f32.mrb[0].mxu0
      %467 = vmatprep.mubr.bf16.mxu0 0
      %468 = vmatmul.mubr.bf16.gmra.mrb[0].mxu0 %v402
      %v469 = vpop.f32.mrb[0].mxu0
      %v470 = vadd.f32 %v340, %v469
      %v471 = vpop.f32.mrb[0].mxu0
      %v472 = vpop.f32.mrb[0].mxu0
      %v473 = vadd.f32 %v340, %v472
      %v474 = vpop.f32.mrb[0].mxu0
      %475 = vmatprep.mubr.bf16.mxu0 0
      %476 = vmatmul.mubr.bf16.gmra.mrb[0].mxu0 %v405
      %v477 = vpop.f32.mrb[0].mxu0
      %v478 = vadd.f32 %v340, %v477
      %v479 = vpop.f32.mrb[0].mxu0
      %v480 = vpop.f32.mrb[0].mxu0
      %v481 = vadd.f32 %v340, %v480
      %v482 = vpop.f32.mrb[0].mxu0
      %483 = vmatprep.mubr.bf16.mxu0 0
      %484 = vmatmul.mubr.bf16.gmra.mrb[0].mxu0 %v408
      %v485 = vpop.f32.mrb[0].mxu0
      %v486 = vadd.f32 %v340, %v485
      %v487 = vpop.f32.mrb[0].mxu0
      %v488 = vpop.f32.mrb[0].mxu0
      %v489 = vadd.f32 %v340, %v488
      %v490 = vpop.f32.mrb[0].mxu0
      %491 = vmatprep.mubr.bf16.mxu0 0
      %492 = vmatmul.mubr.bf16.gmra.mrb[0].mxu0 %v411
      %v493 = vpop.f32.mrb[0].mxu0
      %v494 = vadd.f32 %v340, %v493
      %v495 = vpop.f32.mrb[0].mxu0
      %v496 = vpop.f32.mrb[0].mxu0
      %v497 = vadd.f32 %v340, %v496
      %v498 = vpop.f32.mrb[0].mxu0
      %499 = vmatprep.mubr.bf16.mxu0 0
      %500 = vmatmul.mubr.bf16.gmra.mrb[0].mxu0 %v414
      %v501 = vpop.f32.mrb[0].mxu0
      %v502 = vadd.f32 %v340, %v501
      %v503 = vpop.f32.mrb[0].mxu0
      %v504 = vpop.f32.mrb[0].mxu0
      %v505 = vadd.f32 %v340, %v504
      %v506 = vpop.f32.mrb[0].mxu0
      %507 = vmatprep.mubr.bf16.mxu0 0
      %508 = vmatmul.mubr.bf16.gmra.mrb[0].mxu0 %v417
      %v509 = vpop.f32.mrb[0].mxu0
      %v510 = vadd.f32 %v340, %v509
      %v511 = vpop.f32.mrb[0].mxu0
      %v512 = vpop.f32.mrb[0].mxu0
      %v513 = vadd.f32 %v340, %v512
      %v514 = vpop.f32.mrb[0].mxu0
      %515 = vdwg.mxu0
      %v516 = vpack.c.bf16 %v457, %v454
      %v517 = vpack.c.bf16 %v465, %v462
      %v518 = vpack.c.bf16 %v473, %v470
      %v519 = vpack.c.bf16 %v481, %v478
      %v520 = vpack.c.bf16 %v489, %v486
      %v521 = vpack.c.bf16 %v497, %v494
      %v522 = vpack.c.bf16 %v505, %v502
      %v523 = vpack.c.bf16 %v513, %v510
      %v524 = vld [vmem:[%s4] sm:$0xf]
      %v525 = vld [vmem:[%s4 + $0x4] sm:$0xf]
      %v526 = vld [vmem:[%s4 + $0x8] sm:$0xf]
      %v527 = vld [vmem:[%s4 + $0xc] sm:$0xf]
      %v532 = vunpack.c.l.b16 %v524
      %v533 = vunpack.c.l.b16 %v525
      %v534 = vunpack.c.l.b16 %v526
      %v535 = vunpack.c.l.b16 %v527
      %v536 = vpack.c.b16 %v533, %v532
      %v537 = vpack.c.b16 %v535, %v534
      %540 = vmatprep.subr.bf16.mxu0 0
      %541 = vmatpush1.bf16.msra.mxu0 %v536
      %542 = vmatprep.subr.bf16.mxu0 0
      %543 = vmatpush1.bf16.msra.mxu0 %v537
      %544 = vmatprep.subr.bf16.mxu0 0
      %545 = vmatpush1.bf16.msra.mxu0 0
      %546 = vmatprep.subr.bf16.mxu0 0
      %547 = vmatpush1.bf16.msra.mxu0 0
      %548 = vmatprep.subr.bf16.mxu0 0
      %549 = vmatpush1.bf16.msra.mxu0 0
      %550 = vmatprep.subr.bf16.mxu0 0
      %551 = vmatpush1.bf16.msra.mxu0 0
      %552 = vmatprep.subr.bf16.mxu0 0
      %553 = vmatpush1.bf16.msra.mxu0 0
      %554 = vmatprep.subr.bf16.mxu0 0
      %555 = vmatpush1.bf16.msra.mxu0 0
      %556 = vmatprep.subr.bf16.mxu0 0
      %557 = vmatpush1.bf16.msra.mxu0 0
      %558 = vmatprep.subr.bf16.mxu0 0
      %559 = vmatpush1.bf16.msra.mxu0 0
      %560 = vmatprep.subr.bf16.mxu0 0
      %561 = vmatpush1.bf16.msra.mxu0 0
      %562 = vmatprep.subr.bf16.mxu0 0
      %563 = vmatpush1.bf16.msra.mxu0 0
      %564 = vmatprep.subr.bf16.mxu0 0
      %565 = vmatpush1.bf16.msra.mxu0 0
      %566 = vmatprep.subr.bf16.mxu0 0
      %567 = vmatpush1.bf16.msra.mxu0 0
      %568 = vmatprep.subr.bf16.mxu0 0
      %569 = vmatpush1.bf16.msra.mxu0 0
      %570 = vmatprep.subr.bf16.mxu0 0
      %571 = vmatpush1.bf16.msra.mxu0 0
      %572 = vmatprep.mubr.bf16.mxu0 0
      %573 = vmatmul.mubr.bf16.gmra.mrb[0].mxu0 %v396
      %v574 = vpop.f32.mrb[0].mxu0
      %v575 = vadd.f32 0.0, %v574
      %v576 = vpop.f32.mrb[0].mxu0
      %v577 = vpop.f32.mrb[0].mxu0
      %v578 = vadd.f32 0.0, %v577
      %v579 = vpop.f32.mrb[0].mxu0
      %580 = vmatprep.mubr.bf16.mxu0 0
      %581 = vmatmul.mubr.bf16.gmra.mrb[0].mxu0 %v399
      %v582 = vpop.f32.mrb[0].mxu0
      %v583 = vadd.f32 0.0, %v582
      %v584 = vpop.f32.mrb[0].mxu0
      %v585 = vpop.f32.mrb[0].mxu0
      %v586 = vadd.f32 0.0, %v585
      %v587 = vpop.f32.mrb[0].mxu0
      %588 = vmatprep.mubr.bf16.mxu0 0
      %589 = vmatmul.mubr.bf16.gmra.mrb[0].mxu0 %v402
      %v590 = vpop.f32.mrb[0].mxu0
      %v591 = vadd.f32 0.0, %v590
      %v592 = vpop.f32.mrb[0].mxu0
      %v593 = vpop.f32.mrb[0].mxu0
      %v594 = vadd.f32 0.0, %v593
      %v595 = vpop.f32.mrb[0].mxu0
      %596 = vmatprep.mubr.bf16.mxu0 0
      %597 = vmatmul.mubr.bf16.gmra.mrb[0].mxu0 %v405
      %v598 = vpop.f32.mrb[0].mxu0
      %v599 = vadd.f32 0.0, %v598
      %v600 = vpop.f32.mrb[0].mxu0
      %v601 = vpop.f32.mrb[0].mxu0
      %v602 = vadd.f32 0.0, %v601
      %v603 = vpop.f32.mrb[0].mxu0
      %604 = vmatprep.mubr.bf16.mxu0 0
      %605 = vmatmul.mubr.bf16.gmra.mrb[0].mxu0 %v408
      %v606 = vpop.f32.mrb[0].mxu0
      %v607 = vadd.f32 0.0, %v606
      %v608 = vpop.f32.mrb[0].mxu0
      %v609 = vpop.f32.mrb[0].mxu0
      %v610 = vadd.f32 0.0, %v609
      %v611 = vpop.f32.mrb[0].mxu0
      %612 = vmatprep.mubr.bf16.mxu0 0
      %613 = vmatmul.mubr.bf16.gmra.mrb[0].mxu0 %v411
      %v614 = vpop.f32.mrb[0].mxu0
      %v615 = vadd.f32 0.0, %v614
      %v616 = vpop.f32.mrb[0].mxu0
      %v617 = vpop.f32.mrb[0].mxu0
      %v618 = vadd.f32 0.0, %v617
      %v619 = vpop.f32.mrb[0].mxu0
      %620 = vmatprep.mubr.bf16.mxu0 0
      %621 = vmatmul.mubr.bf16.gmra.mrb[0].mxu0 %v414
      %v622 = vpop.f32.mrb[0].mxu0
      %v623 = vadd.f32 0.0, %v622
      %v624 = vpop.f32.mrb[0].mxu0
      %v625 = vpop.f32.mrb[0].mxu0
      %v626 = vadd.f32 0.0, %v625
      %v627 = vpop.f32.mrb[0].mxu0
      %628 = vmatprep.mubr.bf16.mxu0 0
      %629 = vmatmul.mubr.bf16.gmra.mrb[0].mxu0 %v417
      %v630 = vpop.f32.mrb[0].mxu0
      %v631 = vadd.f32 0.0, %v630
      %v632 = vpop.f32.mrb[0].mxu0
      %v633 = vpop.f32.mrb[0].mxu0
      %v634 = vadd.f32 0.0, %v633
      %v635 = vpop.f32.mrb[0].mxu0
      %636 = vdwg.mxu0
      %v637 = vpack.c.bf16 %v578, %v575
      %v638 = vpack.c.bf16 %v586, %v583
      %v639 = vpack.c.bf16 %v594, %v591
      %v640 = vpack.c.bf16 %v602, %v599
      %v641 = vpack.c.bf16 %v610, %v607
      %v642 = vpack.c.bf16 %v618, %v615
      %v643 = vpack.c.bf16 %v626, %v623
      %v644 = vpack.c.bf16 %v634, %v631
      %v645 = vld [vmem:[%s304] sm:$0xf]
      %v646 = vld [vmem:[%s304 + $0x4] sm:$0xf]
      %v647 = vld [vmem:[%s304 + $0x8] sm:$0xf]
      %v648 = vld [vmem:[%s304 + $0xc] sm:$0xf]
      %v653 = vunpack.c.l.b16 %v645
      %v654 = vunpack.c.l.b16 %v646
      %v655 = vunpack.c.l.b16 %v647
      %v656 = vunpack.c.l.b16 %v648
      %v657 = vpack.c.b16 %v654, %v653
      %v658 = vpack.c.b16 %v656, %v655
      %v662 = vsel %vm394, %v516, 0
      %v665 = vsel %vm394, %v517, 0
      %v668 = vsel %vm394, %v518, 0
      %v671 = vsel %vm394, %v519, 0
      %673 = vmatprep.subr.bf16.mxu0 0
      %674 = vmatpush1.bf16.msra.mxu0 %v657
      %675 = vmatprep.subr.bf16.mxu0 0
      %676 = vmatpush1.bf16.msra.mxu0 %v658
      %677 = vmatprep.subr.bf16.mxu0 0
      %678 = vmatpush1.bf16.msra.mxu0 0
      %679 = vmatprep.subr.bf16.mxu0 0
      %680 = vmatpush1.bf16.msra.mxu0 0
      %681 = vmatprep.subr.bf16.mxu0 0
      %682 = vmatpush1.bf16.msra.mxu0 0
      %683 = vmatprep.subr.bf16.mxu0 0
      %684 = vmatpush1.bf16.msra.mxu0 0
      %685 = vmatprep.subr.bf16.mxu0 0
      %686 = vmatpush1.bf16.msra.mxu0 0
      %687 = vmatprep.subr.bf16.mxu0 0
      %688 = vmatpush1.bf16.msra.mxu0 0
      %689 = vmatprep.subr.bf16.mxu0 0
      %690 = vmatpush1.bf16.msra.mxu0 0
      %691 = vmatprep.subr.bf16.mxu0 0
      %692 = vmatpush1.bf16.msra.mxu0 0
      %693 = vmatprep.subr.bf16.mxu0 0
      %694 = vmatpush1.bf16.msra.mxu0 0
      %695 = vmatprep.subr.bf16.mxu0 0
      %696 = vmatpush1.bf16.msra.mxu0 0
      %697 = vmatprep.subr.bf16.mxu0 0
      %698 = vmatpush1.bf16.msra.mxu0 0
      %699 = vmatprep.subr.bf16.mxu0 0
      %700 = vmatpush1.bf16.msra.mxu0 0
      %701 = vmatprep.subr.bf16.mxu0 0
      %702 = vmatpush1.bf16.msra.mxu0 0
      %703 = vmatprep.subr.bf16.mxu0 0
      %704 = vmatpush1.bf16.msra.mxu0 0
      %705 = vmatprep.mubr.bf16.mxu0 0
      %706 = vmatmul.mubr.bf16.gmra.mrb[0].mxu0 %v662
      %v707 = vpop.f32.mrb[0].mxu0
      %v708 = vadd.f32 0.0, %v707
      %v709 = vpop.f32.mrb[0].mxu0
      %v710 = vpop.f32.mrb[0].mxu0
      %v711 = vadd.f32 0.0, %v710
      %v712 = vpop.f32.mrb[0].mxu0
      %713 = vmatprep.mubr.bf16.mxu0 0
      %714 = vmatmul.mubr.bf16.gmra.mrb[0].mxu0 %v665
      %v715 = vpop.f32.mrb[0].mxu0
      %v716 = vadd.f32 0.0, %v715
      %v717 = vpop.f32.mrb[0].mxu0
      %v718 = vpop.f32.mrb[0].mxu0
      %v719 = vadd.f32 0.0, %v718
      %v720 = vpop.f32.mrb[0].mxu0
      %721 = vmatprep.mubr.bf16.mxu0 0
      %722 = vmatmul.mubr.bf16.gmra.mrb[0].mxu0 %v668
      %v723 = vpop.f32.mrb[0].mxu0
      %v724 = vadd.f32 0.0, %v723
      %v725 = vpop.f32.mrb[0].mxu0
      %v726 = vpop.f32.mrb[0].mxu0
      %v727 = vadd.f32 0.0, %v726
      %v728 = vpop.f32.mrb[0].mxu0
      %729 = vmatprep.mubr.bf16.mxu0 0
      %730 = vmatmul.mubr.bf16.gmra.mrb[0].mxu0 %v671
      %v731 = vpop.f32.mrb[0].mxu0
      %v732 = vadd.f32 0.0, %v731
      %v733 = vpop.f32.mrb[0].mxu0
      %v734 = vpop.f32.mrb[0].mxu0
      %v735 = vadd.f32 0.0, %v734
      %v736 = vpop.f32.mrb[0].mxu0
      %737 = vdwg.mxu0
      %vm738 = vcmask 523264
      %v739 = vsel %vm738, %v708, -inf
      %740 = vmax.xlane.f32.xlu0 %v739
      %v741 = vpop.xlane.xlu0 %740
      %v742 = vsel %vm738, %v711, -inf
      %743 = vmax.xlane.f32.xlu0 %v742
      %v744 = vpop.xlane.xlu0 %743
      %v745 = vsel %vm738, %v716, -inf
      %746 = vmax.xlane.f32.xlu0 %v745
      %v747 = vpop.xlane.xlu0 %746
      %v748 = vsel %vm738, %v719, -inf
      %749 = vmax.xlane.f32.xlu0 %v748
      %v750 = vpop.xlane.xlu0 %749
      %v751 = vsel %vm738, %v724, -inf
      %752 = vmax.xlane.f32.xlu0 %v751
      %v753 = vpop.xlane.xlu0 %752
      %v754 = vsel %vm738, %v727, -inf
      %755 = vmax.xlane.f32.xlu0 %v754
      %v756 = vpop.xlane.xlu0 %755
      %v757 = vsel %vm738, %v732, -inf
      %758 = vmax.xlane.f32.xlu0 %v757
      %v759 = vpop.xlane.xlu0 %758
      %v760 = vsel %vm738, %v735, -inf
      %761 = vmax.xlane.f32.xlu0 %v760
      %v762 = vpop.xlane.xlu0 %761
      %v763 = vsub.f32 %v708, %v741
      %v764 = vsub.f32 %v711, %v744
      %v765 = vsub.f32 %v716, %v747
      %v766 = vsub.f32 %v719, %v750
      %v767 = vsub.f32 %v724, %v753
      %v768 = vsub.f32 %v727, %v756
      %v769 = vsub.f32 %v732, %v759
      %v770 = vsub.f32 %v735, %v762
      %v771 = vmul.f32 %v763, 1.442695
      %v772 = vpow.pop %v771
      %v773 = vmul.f32 %v764, 1.442695
      %v774 = vpow.pop %v773
      %v775 = vmul.f32 %v765, 1.442695
      %v776 = vpow.pop %v775
      %v777 = vmul.f32 %v766, 1.442695
      %v778 = vpow.pop %v777
      %v779 = vmul.f32 %v767, 1.442695
      %v780 = vpow.pop %v779
      %v781 = vmul.f32 %v768, 1.442695
      %v782 = vpow.pop %v781
      %v783 = vmul.f32 %v769, 1.442695
      %v784 = vpow.pop %v783
      %v785 = vmul.f32 %v770, 1.442695
      %v786 = vpow.pop %v785
      %v787 = vsel %vm738, %v772, 0.0
      %788 = vadd.xlane.f32.xlu0 %v787
      %v789 = vpop.xlane.xlu0 %788
      %v790 = vsel %vm738, %v774, 0.0
      %791 = vadd.xlane.f32.xlu0 %v790
      %v792 = vpop.xlane.xlu0 %791
      %v793 = vsel %vm738, %v776, 0.0
      %794 = vadd.xlane.f32.xlu0 %v793
      %v795 = vpop.xlane.xlu0 %794
      %v796 = vsel %vm738, %v778, 0.0
      %797 = vadd.xlane.f32.xlu0 %v796
      %v798 = vpop.xlane.xlu0 %797
      %v799 = vsel %vm738, %v780, 0.0
      %800 = vadd.xlane.f32.xlu0 %v799
      %v801 = vpop.xlane.xlu0 %800
      %v802 = vsel %vm738, %v782, 0.0
      %803 = vadd.xlane.f32.xlu0 %v802
      %v804 = vpop.xlane.xlu0 %803
      %v805 = vsel %vm738, %v784, 0.0
      %806 = vadd.xlane.f32.xlu0 %v805
      %v807 = vpop.xlane.xlu0 %806
      %v808 = vsel %vm738, %v786, 0.0
      %809 = vadd.xlane.f32.xlu0 %v808
      %v810 = vpop.xlane.xlu0 %809
      %v811 = vrcp.pop %v789
      %v812 = vrcp.pop %v792
      %v813 = vrcp.pop %v795
      %v814 = vrcp.pop %v798
      %v815 = vrcp.pop %v801
      %v816 = vrcp.pop %v804
      %v817 = vrcp.pop %v807
      %v818 = vrcp.pop %v810
      %v819 = vmul.f32 %v772, %v811
      %v820 = vmul.f32 %v774, %v812
      %v821 = vmul.f32 %v776, %v813
      %v822 = vmul.f32 %v778, %v814
      %v823 = vmul.f32 %v780, %v815
      %v824 = vmul.f32 %v782, %v816
      %v825 = vmul.f32 %v784, %v817
      %v826 = vmul.f32 %v786, %v818
      %v827 = vpack.c.bf16 %v820, %v819
      %v828 = vpack.c.bf16 %v822, %v821
      %v829 = vpack.c.bf16 %v824, %v823
      %v830 = vpack.c.bf16 %v826, %v825
      %v831 = vld [vmem:[%s5] sm:$0x1]
      %v833 = vlaneseq
      %v834 = vshrl.u32 %v833, 7
      %v835 = vsub.s32 0, %v834
      %v836 = vrot.slane %v831, %v835
      %v839 = vsel %vm738, %v827, 0
      %v842 = vsel %vm738, %v828, 0
      %v845 = vsel %vm738, %v829, 0
      %v848 = vsel %vm738, %v830, 0
      %850 = vmatprep.subr.bf16.mxu0 0
      %851 = vmatpush1.bf16.msra.mxu0 %v637
      %852 = vmatprep.subr.bf16.mxu0 0
      %853 = vmatpush1.bf16.msra.mxu0 %v638
      %854 = vmatprep.subr.bf16.mxu0 0
      %855 = vmatpush1.bf16.msra.mxu0 %v639
      %856 = vmatprep.subr.bf16.mxu0 0
      %857 = vmatpush1.bf16.msra.mxu0 %v640
      %858 = vmatprep.subr.bf16.mxu0 0
      %859 = vmatpush1.bf16.msra.mxu0 0
      %860 = vmatprep.subr.bf16.mxu0 0
      %861 = vmatpush1.bf16.msra.mxu0 0
      %862 = vmatprep.subr.bf16.mxu0 0
      %863 = vmatpush1.bf16.msra.mxu0 0
      %864 = vmatprep.subr.bf16.mxu0 0
      %865 = vmatpush1.bf16.msra.mxu0 0
      %866 = vmatprep.subr.bf16.mxu0 0
      %867 = vmatpush1.bf16.msra.mxu0 0
      %868 = vmatprep.subr.bf16.mxu0 0
      %869 = vmatpush1.bf16.msra.mxu0 0
      %870 = vmatprep.subr.bf16.mxu0 0
      %871 = vmatpush1.bf16.msra.mxu0 0
      %872 = vmatprep.subr.bf16.mxu0 0
      %873 = vmatpush1.bf16.msra.mxu0 0
      %874 = vmatprep.subr.bf16.mxu0 0
      %875 = vmatpush1.bf16.msra.mxu0 0
      %876 = vmatprep.subr.bf16.mxu0 0
      %877 = vmatpush1.bf16.msra.mxu0 0
      %878 = vmatprep.subr.bf16.mxu0 0
      %879 = vmatpush1.bf16.msra.mxu0 0
      %880 = vmatprep.subr.bf16.mxu0 0
      %881 = vmatpush1.bf16.msra.mxu0 0
      %882 = vmatprep.mubr.bf16.mxu0 0
      %883 = vmatmul.mubr.bf16.gmra.mrb[0].mxu0 %v839
      %v884 = vpop.f32.mrb[0].mxu0
      %v885 = vadd.f32 %v836, %v884
      %v886 = vpop.f32.mrb[0].mxu0
      %v887 = vpop.f32.mrb[0].mxu0
      %v888 = vadd.f32 %v836, %v887
      %v889 = vpop.f32.mrb[0].mxu0
      %890 = vmatprep.mubr.bf16.mxu0 0
      %891 = vmatmul.mubr.bf16.gmra.mrb[0].mxu0 %v842
      %v892 = vpop.f32.mrb[0].mxu0
      %v893 = vadd.f32 %v836, %v892
      %v894 = vpop.f32.mrb[0].mxu0
      %v895 = vpop.f32.mrb[0].mxu0
      %v896 = vadd.f32 %v836, %v895
      %v897 = vpop.f32.mrb[0].mxu0
      %898 = vmatprep.mubr.bf16.mxu0 0
      %899 = vmatmul.mubr.bf16.gmra.mrb[0].mxu0 %v845
      %v900 = vpop.f32.mrb[0].mxu0
      %v901 = vadd.f32 %v836, %v900
      %v902 = vpop.f32.mrb[0].mxu0
      %v903 = vpop.f32.mrb[0].mxu0
      %v904 = vadd.f32 %v836, %v903
      %v905 = vpop.f32.mrb[0].mxu0
      %906 = vmatprep.mubr.bf16.mxu0 0
      %907 = vmatmul.mubr.bf16.gmra.mrb[0].mxu0 %v848
      %v908 = vpop.f32.mrb[0].mxu0
      %v909 = vadd.f32 %v836, %v908
      %v910 = vpop.f32.mrb[0].mxu0
      %v911 = vpop.f32.mrb[0].mxu0
      %v912 = vadd.f32 %v836, %v911
      %v913 = vpop.f32.mrb[0].mxu0
      %914 = vdwg.mxu0
      %v915 = vstv %s314
      %v916 = vmul.f32 %v915, %v885
      %v917 = vmul.f32 %v915, %v888
      %v918 = vmul.f32 %v915, %v893
      %v919 = vmul.f32 %v915, %v896
      %v920 = vmul.f32 %v915, %v901
      %v921 = vmul.f32 %v915, %v904
      %v922 = vmul.f32 %v915, %v909
      %v923 = vmul.f32 %v915, %v912
      %924 = vst.msk [vmem:[%s311] sm:$0xff] %vm394, %v916
      %925 = vst.msk [vmem:[%s311 + $0x8] sm:$0xff] %vm394, %v917
      %926 = vst.msk [vmem:[%s311 + $0x10] sm:$0xff] %vm394, %v918
      %927 = vst.msk [vmem:[%s311 + $0x18] sm:$0xff] %vm394, %v919
      %928 = vst.msk [vmem:[%s311 + $0x20] sm:$0xff] %vm394, %v920
      %929 = vst.msk [vmem:[%s311 + $0x28] sm:$0xff] %vm394, %v921
      %930 = vst.msk [vmem:[%s311 + $0x30] sm:$0xff] %vm394, %v922
      %931 = vst.msk [vmem:[%s311 + $0x38] sm:$0xff] %vm394, %v923
      %s932 = scalar_lea.vmem %s304, 16
      %v933 = vld [vmem:[%s932] sm:$0xf]
      %v934 = vld [vmem:[%s932 + $0x4] sm:$0xf]
      %v935 = vld [vmem:[%s932 + $0x8] sm:$0xf]
      %v936 = vld [vmem:[%s932 + $0xc] sm:$0xf]
      %v941 = vunpack.c.l.b16 %v933
      %v942 = vunpack.c.l.b16 %v934
      %v943 = vunpack.c.l.b16 %v935
      %v944 = vunpack.c.l.b16 %v936
      %v945 = vpack.c.b16 %v942, %v941
      %v946 = vpack.c.b16 %v944, %v943
      %v950 = vsel %vm394, %v520, 0
      %v953 = vsel %vm394, %v521, 0
      %v956 = vsel %vm394, %v522, 0
      %v959 = vsel %vm394, %v523, 0
      %961 = vmatprep.subr.bf16.mxu0 0
      %962 = vmatpush1.bf16.msra.mxu0 %v945
      %963 = vmatprep.subr.bf16.mxu0 0
      %964 = vmatpush1.bf16.msra.mxu0 %v946
      %965 = vmatprep.subr.bf16.mxu0 0
      %966 = vmatpush1.bf16.msra.mxu0 0
      %967 = vmatprep.subr.bf16.mxu0 0
      %968 = vmatpush1.bf16.msra.mxu0 0
      %969 = vmatprep.subr.bf16.mxu0 0
      %970 = vmatpush1.bf16.msra.mxu0 0
      %971 = vmatprep.subr.bf16.mxu0 0
      %972 = vmatpush1.bf16.msra.mxu0 0
      %973 = vmatprep.subr.bf16.mxu0 0
      %974 = vmatpush1.bf16.msra.mxu0 0
      %975 = vmatprep.subr.bf16.mxu0 0
      %976 = vmatpush1.bf16.msra.mxu0 0
      %977 = vmatprep.subr.bf16.mxu0 0
      %978 = vmatpush1.bf16.msra.mxu0 0
      %979 = vmatprep.subr.bf16.mxu0 0
      %980 = vmatpush1.bf16.msra.mxu0 0
      %981 = vmatprep.subr.bf16.mxu0 0
      %982 = vmatpush1.bf16.msra.mxu0 0
      %983 = vmatprep.subr.bf16.mxu0 0
      %984 = vmatpush1.bf16.msra.mxu0 0
      %985 = vmatprep.subr.bf16.mxu0 0
      %986 = vmatpush1.bf16.msra.mxu0 0
      %987 = vmatprep.subr.bf16.mxu0 0
      %988 = vmatpush1.bf16.msra.mxu0 0
      %989 = vmatprep.subr.bf16.mxu0 0
      %990 = vmatpush1.bf16.msra.mxu0 0
      %991 = vmatprep.subr.bf16.mxu0 0
      %992 = vmatpush1.bf16.msra.mxu0 0
      %993 = vmatprep.mubr.bf16.mxu0 0
      %994 = vmatmul.mubr.bf16.gmra.mrb[0].mxu0 %v950
      %v995 = vpop.f32.mrb[0].mxu0
      %v996 = vadd.f32 0.0, %v995
      %v997 = vpop.f32.mrb[0].mxu0
      %v998 = vpop.f32.mrb[0].mxu0
      %v999 = vadd.f32 0.0, %v998
      %v1000 = vpop.f32.mrb[0].mxu0
      %1001 = vmatprep.mubr.bf16.mxu0 0
      %1002 = vmatmul.mubr.bf16.gmra.mrb[0].mxu0 %v953
      %v1003 = vpop.f32.mrb[0].mxu0
      %v1004 = vadd.f32 0.0, %v1003
      %v1005 = vpop.f32.mrb[0].mxu0
      %v1006 = vpop.f32.mrb[0].mxu0
      %v1007 = vadd.f32 0.0, %v1006
      %v1008 = vpop.f32.mrb[0].mxu0
      %1009 = vmatprep.mubr.bf16.mxu0 0
      %1010 = vmatmul.mubr.bf16.gmra.mrb[0].mxu0 %v956
      %v1011 = vpop.f32.mrb[0].mxu0
      %v1012 = vadd.f32 0.0, %v1011
      %v1013 = vpop.f32.mrb[0].mxu0
      %v1014 = vpop.f32.mrb[0].mxu0
      %v1015 = vadd.f32 0.0, %v1014
      %v1016 = vpop.f32.mrb[0].mxu0
      %1017 = vmatprep.mubr.bf16.mxu0 0
      %1018 = vmatmul.mubr.bf16.gmra.mrb[0].mxu0 %v959
      %v1019 = vpop.f32.mrb[0].mxu0
      %v1020 = vadd.f32 0.0, %v1019
      %v1021 = vpop.f32.mrb[0].mxu0
      %v1022 = vpop.f32.mrb[0].mxu0
      %v1023 = vadd.f32 0.0, %v1022
      %v1024 = vpop.f32.mrb[0].mxu0
      %1025 = vdwg.mxu0
      %v1026 = vsel %vm738, %v996, -inf
      %1027 = vmax.xlane.f32.xlu0 %v1026
      %v1028 = vpop.xlane.xlu0 %1027
      %v1029 = vsel %vm738, %v999, -inf
      %1030 = vmax.xlane.f32.xlu0 %v1029
      %v1031 = vpop.xlane.xlu0 %1030
      %v1032 = vsel %vm738, %v1004, -inf
      %1033 = vmax.xlane.f32.xlu0 %v1032
      %v1034 = vpop.xlane.xlu0 %1033
      %v1035 = vsel %vm738, %v1007, -inf
      %1036 = vmax.xlane.f32.xlu0 %v1035
      %v1037 = vpop.xlane.xlu0 %1036
      %v1038 = vsel %vm738, %v1012, -inf
      %1039 = vmax.xlane.f32.xlu0 %v1038
      %v1040 = vpop.xlane.xlu0 %1039
      %v1041 = vsel %vm738, %v1015, -inf
      %1042 = vmax.xlane.f32.xlu0 %v1041
      %v1043 = vpop.xlane.xlu0 %1042
      %v1044 = vsel %vm738, %v1020, -inf
      %1045 = vmax.xlane.f32.xlu0 %v1044
      %v1046 = vpop.xlane.xlu0 %1045
      %v1047 = vsel %vm738, %v1023, -inf
      %1048 = vmax.xlane.f32.xlu0 %v1047
      %v1049 = vpop.xlane.xlu0 %1048
      %v1050 = vsub.f32 %v996, %v1028
      %v1051 = vsub.f32 %v999, %v1031
      %v1052 = vsub.f32 %v1004, %v1034
      %v1053 = vsub.f32 %v1007, %v1037
      %v1054 = vsub.f32 %v1012, %v1040
      %v1055 = vsub.f32 %v1015, %v1043
      %v1056 = vsub.f32 %v1020, %v1046
      %v1057 = vsub.f32 %v1023, %v1049
      %v1058 = vmul.f32 %v1050, 1.442695
      %v1059 = vpow.pop %v1058
      %v1060 = vmul.f32 %v1051, 1.442695
      %v1061 = vpow.pop %v1060
      %v1062 = vmul.f32 %v1052, 1.442695
      %v1063 = vpow.pop %v1062
      %v1064 = vmul.f32 %v1053, 1.442695
      %v1065 = vpow.pop %v1064
      %v1066 = vmul.f32 %v1054, 1.442695
      %v1067 = vpow.pop %v1066
      %v1068 = vmul.f32 %v1055, 1.442695
      %v1069 = vpow.pop %v1068
      %v1070 = vmul.f32 %v1056, 1.442695
      %v1071 = vpow.pop %v1070
      %v1072 = vmul.f32 %v1057, 1.442695
      %v1073 = vpow.pop %v1072
      %v1074 = vsel %vm738, %v1059, 0.0
      %1075 = vadd.xlane.f32.xlu0 %v1074
      %v1076 = vpop.xlane.xlu0 %1075
      %v1077 = vsel %vm738, %v1061, 0.0
      %1078 = vadd.xlane.f32.xlu0 %v1077
      %v1079 = vpop.xlane.xlu0 %1078
      %v1080 = vsel %vm738, %v1063, 0.0
      %1081 = vadd.xlane.f32.xlu0 %v1080
      %v1082 = vpop.xlane.xlu0 %1081
      %v1083 = vsel %vm738, %v1065, 0.0
      %1084 = vadd.xlane.f32.xlu0 %v1083
      %v1085 = vpop.xlane.xlu0 %1084
      %v1086 = vsel %vm738, %v1067, 0.0
      %1087 = vadd.xlane.f32.xlu0 %v1086
      %v1088 = vpop.xlane.xlu0 %1087
      %v1089 = vsel %vm738, %v1069, 0.0
      %1090 = vadd.xlane.f32.xlu0 %v1089
      %v1091 = vpop.xlane.xlu0 %1090
      %v1092 = vsel %vm738, %v1071, 0.0
      %1093 = vadd.xlane.f32.xlu0 %v1092
      %v1094 = vpop.xlane.xlu0 %1093
      %v1095 = vsel %vm738, %v1073, 0.0
      %1096 = vadd.xlane.f32.xlu0 %v1095
      %v1097 = vpop.xlane.xlu0 %1096
      %v1098 = vrcp.pop %v1076
      %v1099 = vrcp.pop %v1079
      %v1100 = vrcp.pop %v1082
      %v1101 = vrcp.pop %v1085
      %v1102 = vrcp.pop %v1088
      %v1103 = vrcp.pop %v1091
      %v1104 = vrcp.pop %v1094
      %v1105 = vrcp.pop %v1097
      %v1106 = vmul.f32 %v1059, %v1098
      %v1107 = vmul.f32 %v1061, %v1099
      %v1108 = vmul.f32 %v1063, %v1100
      %v1109 = vmul.f32 %v1065, %v1101
      %v1110 = vmul.f32 %v1067, %v1102
      %v1111 = vmul.f32 %v1069, %v1103
      %v1112 = vmul.f32 %v1071, %v1104
      %v1113 = vmul.f32 %v1073, %v1105
      %v1114 = vpack.c.bf16 %v1107, %v1106
      %v1115 = vpack.c.bf16 %v1109, %v1108
      %v1116 = vpack.c.bf16 %v1111, %v1110
      %v1117 = vpack.c.bf16 %v1113, %v1112
      %v1118 = vld [vmem:[%s5] sm:$0x1]
      %v1120 = vlaneseq
      %v1121 = vshrl.u32 %v1120, 7
      %v1122 = vsub.s32 0, %v1121
      %v1123 = vrot.slane %v1118, %v1122
      %v1126 = vsel %vm738, %v1114, 0
      %v1129 = vsel %vm738, %v1115, 0
      %v1132 = vsel %vm738, %v1116, 0
      %v1135 = vsel %vm738, %v1117, 0
      %1137 = vmatprep.subr.bf16.mxu0 0
      %1138 = vmatpush1.bf16.msra.mxu0 %v641
      %1139 = vmatprep.subr.bf16.mxu0 0
      %1140 = vmatpush1.bf16.msra.mxu0 %v642
      %1141 = vmatprep.subr.bf16.mxu0 0
      %1142 = vmatpush1.bf16.msra.mxu0 %v643
      %1143 = vmatprep.subr.bf16.mxu0 0
      %1144 = vmatpush1.bf16.msra.mxu0 %v644
      %1145 = vmatprep.subr.bf16.mxu0 0
      %1146 = vmatpush1.bf16.msra.mxu0 0
      %1147 = vmatprep.subr.bf16.mxu0 0
      %1148 = vmatpush1.bf16.msra.mxu0 0
      %1149 = vmatprep.subr.bf16.mxu0 0
      %1150 = vmatpush1.bf16.msra.mxu0 0
      %1151 = vmatprep.subr.bf16.mxu0 0
      %1152 = vmatpush1.bf16.msra.mxu0 0
      %1153 = vmatprep.subr.bf16.mxu0 0
      %1154 = vmatpush1.bf16.msra.mxu0 0
      %1155 = vmatprep.subr.bf16.mxu0 0
      %1156 = vmatpush1.bf16.msra.mxu0 0
      %1157 = vmatprep.subr.bf16.mxu0 0
      %1158 = vmatpush1.bf16.msra.mxu0 0
      %1159 = vmatprep.subr.bf16.mxu0 0
      %1160 = vmatpush1.bf16.msra.mxu0 0
      %1161 = vmatprep.subr.bf16.mxu0 0
      %1162 = vmatpush1.bf16.msra.mxu0 0
      %1163 = vmatprep.subr.bf16.mxu0 0
      %1164 = vmatpush1.bf16.msra.mxu0 0
      %1165 = vmatprep.subr.bf16.mxu0 0
      %1166 = vmatpush1.bf16.msra.mxu0 0
      %1167 = vmatprep.subr.bf16.mxu0 0
      %1168 = vmatpush1.bf16.msra.mxu0 0
      %1169 = vmatprep.mubr.bf16.mxu0 0
      %1170 = vmatmul.mubr.bf16.gmra.mrb[0].mxu0 %v1126
      %v1171 = vpop.f32.mrb[0].mxu0
      %v1172 = vadd.f32 %v1123, %v1171
      %v1173 = vpop.f32.mrb[0].mxu0
      %v1174 = vpop.f32.mrb[0].mxu0
      %v1175 = vadd.f32 %v1123, %v1174
      %v1176 = vpop.f32.mrb[0].mxu0
      %1177 = vmatprep.mubr.bf16.mxu0 0
      %1178 = vmatmul.mubr.bf16.gmra.mrb[0].mxu0 %v1129
      %v1179 = vpop.f32.mrb[0].mxu0
      %v1180 = vadd.f32 %v1123, %v1179
      %v1181 = vpop.f32.mrb[0].mxu0
      %v1182 = vpop.f32.mrb[0].mxu0
      %v1183 = vadd.f32 %v1123, %v1182
      %v1184 = vpop.f32.mrb[0].mxu0
      %1185 = vmatprep.mubr.bf16.mxu0 0
      %1186 = vmatmul.mubr.bf16.gmra.mrb[0].mxu0 %v1132
      %v1187 = vpop.f32.mrb[0].mxu0
      %v1188 = vadd.f32 %v1123, %v1187
      %v1189 = vpop.f32.mrb[0].mxu0
      %v1190 = vpop.f32.mrb[0].mxu0
      %v1191 = vadd.f32 %v1123, %v1190
      %v1192 = vpop.f32.mrb[0].mxu0
      %1193 = vmatprep.mubr.bf16.mxu0 0
      %1194 = vmatmul.mubr.bf16.gmra.mrb[0].mxu0 %v1135
      %v1195 = vpop.f32.mrb[0].mxu0
      %v1196 = vadd.f32 %v1123, %v1195
      %v1197 = vpop.f32.mrb[0].mxu0
      %v1198 = vpop.f32.mrb[0].mxu0
      %v1199 = vadd.f32 %v1123, %v1198
      %v1200 = vpop.f32.mrb[0].mxu0
      %1201 = vdwg.mxu0
      %v1202 = vmul.f32 %v915, %v1172
      %v1203 = vmul.f32 %v915, %v1175
      %v1204 = vmul.f32 %v915, %v1180
      %v1205 = vmul.f32 %v915, %v1183
      %v1206 = vmul.f32 %v915, %v1188
      %v1207 = vmul.f32 %v915, %v1191
      %v1208 = vmul.f32 %v915, %v1196
      %v1209 = vmul.f32 %v915, %v1199
      %s1210 = scalar_lea.vmem %s311, 64
      %1211 = vst.msk [vmem:[%s1210] sm:$0xff] %vm394, %v1202
      %1212 = vst.msk [vmem:[%s1210 + $0x8] sm:$0xff] %vm394, %v1203
      %1213 = vst.msk [vmem:[%s1210 + $0x10] sm:$0xff] %vm394, %v1204
      %1214 = vst.msk [vmem:[%s1210 + $0x18] sm:$0xff] %vm394, %v1205
      %1215 = vst.msk [vmem:[%s1210 + $0x20] sm:$0xff] %vm394, %v1206
      %1216 = vst.msk [vmem:[%s1210 + $0x28] sm:$0xff] %vm394, %v1207
      %1217 = vst.msk [vmem:[%s1210 + $0x30] sm:$0xff] %vm394, %v1208
      %1218 = vst.msk [vmem:[%s1210 + $0x38] sm:$0xff] %vm394, %v1209
      %s1219 = smul.u32 2, %s19
      %p1220 = scmp.lt.s32.totalorder %s1219, 3
      %s1221 = scalar_select %p1220, %s1219, 3
      %s1222 = smul.addr %s1221, 8
      %s1223 = smul.addr %s1222, 8
      %s1224 = scalar_lea.vmem %s7, %s1223
      // Predicated region
      $region49: #{tpu_custom_call.1} parent=47 // pred_check
        %p1225 = pneg %p194
      $region50: #{tpu_custom_call.1} parent=47 // pred_check_branch
        %1227 = sbr.rel (%p1225) target = $region52
      $region51: #{tpu_custom_call.1} parent=47 // pred_region
        %s1228 = smul.u32 2, %s19
      $region52: #{tpu_custom_call.1} parent=47 // pred_fallthru
        _
    $region48: #{tpu_custom_call.1} parent=5 // pred_fallthru
      _
    %p1229 = scmp.le.s32.totalorder 2, %s14
    // Predicated region
    $region53: #{tpu_custom_call.1} parent=5 // pred_check
      %p1230 = pneg %p1229
    $region54: #{tpu_custom_call.1} parent=5 // pred_check_branch
      %1232 = sbr.rel (%p1230) target = $region56
    $region55: #{tpu_custom_call.1} parent=5 // pred_region
      %s1233 = ssub.s32 %s14, 2
      // Predicated region
      $region57: #{tpu_custom_call.1} parent=55 // pred_check
        %p1234 = pneg %p200
      $region58: #{tpu_custom_call.1} parent=55 // pred_check_branch
        %1236 = sbr.rel (%p1234) target = $region60
      $region59: #{tpu_custom_call.1} parent=55 // pred_region
        %s1237 = smul.u32 2, %s20
        %p1238 = scmp.lt.s32.totalorder %s1237, 3
        %s1239 = scalar_select %p1238, %s1237, 3
        %s1240 = smul.addr %s1239, 8
        %s1241 = smul.addr %s1240, 8
        %s1242 = scalar_lea.vmem %s7, %s1241
      $region60: #{tpu_custom_call.1} parent=55 // pred_fallthru
        _
    $region56: #{tpu_custom_call.1} parent=5 // pred_fallthru
      _
  $region6: #{tpu_custom_call.1} parent=0 // loop_footer
    %s18 = sadd.s32 1, %s14
  $region7: #{tpu_custom_call.1} parent=0 // loop_footer_branch
    %13 = sbr.rel target = $region3
  $region8: #{tpu_custom_call.1} parent=0 // loop_exit
    _

</llo_original>
